<compile_context>
chip_gen: v5e
topology: v5e:2x2
jax: 0.10.0
libtpu: 0.0.40
codegen_flags: <defaults>
</compile_context>

<pallas_src>
import functools

import jax
import jax.numpy as jnp
from jax.experimental import pallas as pl
from jax.experimental.pallas import tpu as pltpu


# ---------------------------------------------------------------------------
# Helpers
# ---------------------------------------------------------------------------

def _round_up(v, m):
    return ((v + m - 1) // m) * m


def _sublane_multiple(dtype):
    # Second-to-last-dim alignment: 8 for 4-byte, 16 for 2-byte, 32 for 1-byte dtypes.
    return max(8, 32 // jnp.dtype(dtype).itemsize)


def _padded_2d_bytes(rows, cols, dtype):
    """VMEM footprint of a [rows, cols] tile after (sublane, lane) padding."""
    itemsize = jnp.dtype(dtype).itemsize
    sub = max(8, 32 // itemsize)
    return _round_up(rows, sub) * _round_up(cols, 128) * itemsize


def _vmem_capacity_bytes():
    """Per-core VMEM capacity; conservative fallback if the query is unavailable."""
    try:
        cap = int(pltpu.get_tpu_info().vmem_capacity_bytes)
        if cap > 0:
            return cap
    except Exception:
        pass
    return 64 << 20  # v7x per-TensorCore VMEM (smallest across generations)


def _buffered_one_supported():
    # Single-buffering (no double-buffer) for resident weights, if the API supports it.
    try:
        pl.BlockSpec((8, 128), lambda i: (0, 0), pipeline_mode=pl.Buffered(1))
        return True
    except Exception:
        return False


_HAS_BUFFERED_1 = _buffered_one_supported()


def _const_spec(shape, ngrid):
    """BlockSpec for a weight/bias that stays VMEM-resident (constant index_map)."""
    if ngrid == 1:
        idx = lambda i: (0,) * len(shape)
    else:
        idx = lambda i, k: (0,) * len(shape)
    if _HAS_BUFFERED_1:
        return pl.BlockSpec(shape, idx, pipeline_mode=pl.Buffered(1))
    return pl.BlockSpec(shape, idx)


def _pick_batch_tile(n, per_row_bytes, budget_bytes, sub_mult):
    tb = int(budget_bytes // max(per_row_bytes, 1))
    tb = max(sub_mult, min(tb, 1024))
    tb = (tb // sub_mult) * sub_mult
    # Guarantee >= 2 grid steps when the batch allows it (dual-TC on v7x + pipelining),
    # without dropping below the sublane multiple.
    half = _round_up((n + 1) // 2, sub_mult)
    if half < n:
        tb = min(tb, half)
    if tb >= n:
        return n
    return tb


# ---------------------------------------------------------------------------
# Kernels
# ---------------------------------------------------------------------------

def _neck_pool_kernel(x_ref, w1_ref, b1_ref, w2_ref, b2_ref, o_ref, *, inv_hw):
    # x_ref: [TB, C, HW] (NCHW view; no host transpose).  Pool over HW (lane axis),
    # accumulate in f32, then fc -> relu -> fc.  Reciprocal-multiply instead of divide.
    pooled = jnp.sum(x_ref[...], axis=2, dtype=jnp.float32) * inv_hw          # [TB, C]
    h = jnp.dot(pooled, w1_ref[...], preferred_element_type=jnp.float32)      # [TB, hid]
    h = jnp.maximum(h + b1_ref[...], 0.0)
    out = jnp.dot(h, w2_ref[...], preferred_element_type=jnp.float32)         # [TB, out_pad]
    o_ref[...] = (out + b2_ref[...]).astype(o_ref.dtype)


def _neck_nopool_kernel(x_ref, w1_ref, b1_ref, w2_ref, b2_ref, o_ref, h_acc):
    # K-tiled first matmul: accumulate h in an f32 VMEM scratch across the reduction
    # grid axis; finalize (bias, relu, second fc, store) on the last K step.
    k = pl.program_id(1)

    @pl.when(k == 0)
    def _():
        h_acc[...] = jnp.zeros_like(h_acc)

    h_acc[...] += jnp.dot(x_ref[...], w1_ref[...],
                          preferred_element_type=jnp.float32)

    @pl.when(k == pl.num_programs(1) - 1)
    def _():
        h = jnp.maximum(h_acc[...] + b1_ref[...], 0.0)
        out = jnp.dot(h, w2_ref[...], preferred_element_type=jnp.float32)
        o_ref[...] = (out + b2_ref[...]).astype(o_ref.dtype)


# ---------------------------------------------------------------------------
# Wrapper
# ---------------------------------------------------------------------------

def nonlinear_neck_v1(x_nchw, w1, b1, w2, b2, with_avg_pool=True):
    """Forward pass of NonLinearNeckV1.

    x_nchw : [N, C, H, W]            (keep bf16 if the backbone produces bf16 — the
                                      kernel accumulates in f32 internally)
    w1     : [in_features, hid]      (transposed PyTorch Linear weight)
    b1     : [hid]
    w2     : [hid, out_channels]     (transposed PyTorch Linear weight)
    b2     : [out_channels]
    """
    N, C, H, W = x_nchw.shape
    HW = H * W
    hid = w1.shape[1]
    out_channels = w2.shape[1]
    assert w2.shape[0] == hid and b1.shape[-1] == hid and b2.shape[-1] == out_channels

    out_dtype = x_nchw.dtype
    x_itemsize = jnp.dtype(x_nchw.dtype).itemsize
    out_itemsize = jnp.dtype(out_dtype).itemsize
    sub_mult = _sublane_multiple(out_dtype)

    # Lane-dense output: pad the output-channel dim to a multiple of 128 (unmasked vst).
    out_pad = _round_up(out_channels, 128)
    if out_pad != out_channels:
        w2p = jnp.pad(w2, ((0, 0), (0, out_pad - out_channels)))
        b2p = jnp.pad(b2, (0, out_pad - out_channels))
    else:
        w2p, b2p = w2, b2
    b1r = b1.reshape(1, hid)
    b2r = b2p.reshape(1, out_pad)

    cap = _vmem_capacity_bytes()
    weight_mult = 1 if _HAS_BUFFERED_1 else 2   # resident weights: single vs double buffer

    if with_avg_pool:
        assert w1.shape[0] == C, f"w1 first dim {w1.shape[0]} must equal C={C}"
        # Free reshape of the NCHW tensor (no HBM transpose pass).
        x3 = x_nchw.reshape(N, C, HW)
        inv_hw = 1.0 / float(HW)

        x_row_vmem = _padded_2d_bytes(C, HW, x_nchw.dtype)      # one batch row of x tile
        out_row_vmem = out_pad * out_itemsize                   # out_pad is 128-aligned
        w_resident_vmem = weight_mult * (
            _padded_2d_bytes(C, hid, w1.dtype)
            + _padded_2d_bytes(1, hid, b1r.dtype)
            + _padded_2d_bytes(hid, out_pad, w2p.dtype)
            + _padded_2d_bytes(1, out_pad, b2r.dtype))

        per_row = 2 * x_row_vmem + 2 * out_row_vmem             # double-buffered tiles
        budget = int(0.85 * cap) - w_resident_vmem - (6 << 20)
        TB = _pick_batch_tile(N, per_row, budget, sub_mult)
        grid = (pl.cdiv(N, TB),)

        need = TB * per_row + w_resident_vmem + (4 << 20)
        vmem_limit = min(max(need, 32 << 20), int(0.9 * cap))

        weight_hbm_bytes = sum(int(a.size) * jnp.dtype(a.dtype).itemsize
                               for a in (w1, b1r, w2p, b2r))
        cost = pl.CostEstimate(
            flops=2 * N * C * hid + 2 * N * hid * out_pad,
            transcendentals=0,
            bytes_accessed=int(x3.size) * x_itemsize + weight_hbm_bytes
            + N * out_pad * out_itemsize,
        )

        out_padded = pl.pallas_call(
            functools.partial(_neck_pool_kernel, inv_hw=inv_hw),
            out_shape=jax.ShapeDtypeStruct((N, out_pad), out_dtype),
            grid=grid,
            in_specs=[
                pl.BlockSpec((TB, C, HW), lambda i: (i, 0, 0)),   # x: tiled over batch
                _const_spec((C, hid), 1),                         # resident weights
                _const_spec((1, hid), 1),
                _const_spec((hid, out_pad), 1),
                _const_spec((1, out_pad), 1),
            ],
            out_specs=pl.BlockSpec((TB, out_pad), lambda i: (i, 0)),
            compiler_params=pltpu.CompilerParams(
                dimension_semantics=("parallel",),
                vmem_limit_bytes=int(vmem_limit),
            ),
            cost_estimate=cost,
        )(x3, w1, b1r, w2p, b2r)

    else:
        F = C * H * W
        assert w1.shape[0] == F, f"w1 first dim {w1.shape[0]} must equal C*H*W={F}"
        x2 = x_nchw.reshape(N, F)

        # K-tile the (potentially huge) flattened feature dim so w1 never has to be
        # fully VMEM-resident; zero-pad F to a tile multiple (zeros add nothing).
        tk = min(_round_up(F, 128), 1024)
        F_pad = _round_up(F, tk)
        if F_pad != F:
            x2 = jnp.pad(x2, ((0, 0), (0, F_pad - F)))
            w1p = jnp.pad(w1, ((0, F_pad - F), (0, 0)))
        else:
            w1p = w1

        w1_tile_vmem = 2 * _padded_2d_bytes(tk, hid, w1p.dtype)  # double-buffered K tile
        small_resident = weight_mult * (
            _padded_2d_bytes(1, hid, b1r.dtype)
            + _padded_2d_bytes(hid, out_pad, w2p.dtype)
            + _padded_2d_bytes(1, out_pad, b2r.dtype))
        per_row = (2 * _round_up(tk, 128) * x_itemsize           # x tile (double-buffered)
                   + 2 * out_pad * out_itemsize                  # out tile
                   + _round_up(hid, 128) * 4)                    # f32 h_acc scratch
        budget = int(0.85 * cap) - w1_tile_vmem - small_resident - (6 << 20)
        TB = _pick_batch_tile(N, per_row, budget, sub_mult)
        grid = (pl.cdiv(N, TB), F_pad // tk)

        need = TB * per_row + w1_tile_vmem + small_resident + (4 << 20)
        vmem_limit = min(max(need, 32 << 20), int(0.9 * cap))

        small_hbm_bytes = sum(int(a.size) * jnp.dtype(a.dtype).itemsize
                              for a in (b1r, w2p, b2r))
        cost = pl.CostEstimate(
            flops=2 * N * F_pad * hid + 2 * N * hid * out_pad,
            transcendentals=0,
            bytes_accessed=int(x2.size) * x_itemsize
            + int(w1p.size) * jnp.dtype(w1p.dtype).itemsize
            + small_hbm_bytes + N * out_pad * out_itemsize,
        )

        out_padded = pl.pallas_call(
            _neck_nopool_kernel,
            out_shape=jax.ShapeDtypeStruct((N, out_pad), out_dtype),
            grid=grid,
            in_specs=[
                pl.BlockSpec((TB, tk), lambda i, k: (i, k)),      # x: (batch, K) tiles
                pl.BlockSpec((tk, hid), lambda i, k: (k, 0)),     # w1: K-tiled
                _const_spec((1, hid), 2),                         # resident small weights
                _const_spec((hid, out_pad), 2),
                _const_spec((1, out_pad), 2),
            ],
            out_specs=pl.BlockSpec((TB, out_pad), lambda i, k: (i, 0)),
            scratch_shapes=[pltpu.VMEM((TB, hid), jnp.float32)],
            compiler_params=pltpu.CompilerParams(
                dimension_semantics=("parallel", "arbitrary"),
                vmem_limit_bytes=int(vmem_limit),
            ),
            cost_estimate=cost,
        )(x2, w1p, b1r, w2p, b2r)

    if out_pad != out_channels:
        return out_padded[:, :out_channels]
    return out_padded


if __name__ == "__main__":
    key = jax.random.PRNGKey(0)
    kx, kw1, kw2, kx2, kw1b = jax.random.split(key, 5)

    # ---- with_avg_pool=True (MoCo v2 default): small, module-consistent shapes ----
    N, C, H, W = 2, 4, 16, 16
    hid_channels, out_channels = 32, 16

    x = jax.random.normal(kx, (N, C, H, W), dtype=jnp.float32)
    # PyTorch Linear weight is [out, in]; the kernel consumes the transpose [in, out].
    # Init mirrors _init_weights(init_linear='normal', std=0.01, bias=0.0).
    w1 = (0.01 * jax.random.normal(kw1, (hid_channels, C), dtype=jnp.float32)).T
    b1 = jnp.zeros((hid_channels,), dtype=jnp.float32)
    w2 = (0.01 * jax.random.normal(kw2, (out_channels, hid_channels), dtype=jnp.float32)).T
    b2 = jnp.zeros((out_channels,), dtype=jnp.float32)

    out = jax.block_until_ready(nonlinear_neck_v1(x, w1, b1, w2, b2, with_avg_pool=True))

    pooled_ref = jnp.mean(x, axis=(2, 3))                         # AdaptiveAvgPool2d + view
    ref = jnp.maximum(pooled_ref @ w1 + b1, 0.0) @ w2 + b2        # fc-relu-fc
    assert out.shape == (N, out_channels)
    assert jnp.allclose(out, ref, atol=1e-5, rtol=1e-5), "pool path mismatch vs reference"

    # ---- with_avg_pool=False: flattened-feature path (K-tiled first matmul) ----
    C2 = 8                                                        # F = 2048 -> 2 K steps
    x_np = jax.random.normal(kx2, (N, C2, H, W), dtype=jnp.float32)
    F = C2 * H * W
    w1b = (0.01 * jax.random.normal(kw1b, (hid_channels, F), dtype=jnp.float32)).T
    out2 = jax.block_until_ready(
        nonlinear_neck_v1(x_np, w1b, b1, w2, b2, with_avg_pool=False))
    ref2 = jnp.maximum(x_np.reshape(N, -1) @ w1b + b1, 0.0) @ w2 + b2
    assert out2.shape == (N, out_channels)
    assert jnp.allclose(out2, ref2, atol=1e-4, rtol=1e-4), "no-pool path mismatch vs reference"

    print("KERNEL_OK")
</pallas_src>

<mosaic_0001>
module attributes {stable_mosaic.version = 11 : i64} {
  func.func @_neck_pool_kernel(%arg0: i32, %arg1: memref<2x4x256xf32, #tpu.memory_space<vmem>>, %arg2: memref<4x32xf32, #tpu.memory_space<vmem>>, %arg3: memref<1x32xf32, #tpu.memory_space<vmem>>, %arg4: memref<32x128xf32, #tpu.memory_space<vmem>>, %arg5: memref<1x128xf32, #tpu.memory_space<vmem>>, %arg6: memref<2x128xf32, #tpu.memory_space<vmem>>) attributes {dimension_semantics = [#tpu.dimension_semantics<parallel>], iteration_bounds = array<i64: 1>, scalar_prefetch = 0 : i64, scratch_operands = 0 : i64, tpu.core_type = #tpu.core_type<tc>, window_params = [{transform_indices = @transform_0, window_bounds = array<i64: 2, 4, 256>}, {pipeline_mode = #tpu.pipeline_mode<synchronous>, transform_indices = @transform_1, window_bounds = array<i64: 4, 32>}, {pipeline_mode = #tpu.pipeline_mode<synchronous>, transform_indices = @transform_2, window_bounds = array<i64: 1, 32>}, {pipeline_mode = #tpu.pipeline_mode<synchronous>, transform_indices = @transform_3, window_bounds = array<i64: 32, 128>}, {pipeline_mode = #tpu.pipeline_mode<synchronous>, transform_indices = @transform_4, window_bounds = array<i64: 1, 128>}, {transform_indices = @transform_5, window_bounds = array<i64: 2, 128>}]} {
    %c0 = arith.constant 0 : index
    %c0_0 = arith.constant 0 : index
    %c0_1 = arith.constant 0 : index
    %0 = vector.load %arg1[%c0, %c0_0, %c0_1] : memref<2x4x256xf32, #tpu.memory_space<vmem>>, vector<2x4x256xf32>
    %cst = arith.constant dense<0.000000e+00> : vector<2x4xf32>
    %1 = vector.multi_reduction <add>, %0, %cst [2] : vector<2x4x256xf32> to vector<2x4xf32>
    %cst_2 = arith.constant 3.906250e-03 : f32
    %2 = vector.broadcast %cst_2 : f32 to vector<2x4xf32>
    %3 = arith.mulf %1, %2 : vector<2x4xf32>
    %c0_3 = arith.constant 0 : index
    %c0_4 = arith.constant 0 : index
    %4 = vector.load %arg2[%c0_3, %c0_4] : memref<4x32xf32, #tpu.memory_space<vmem>>, vector<4x32xf32>
    %cst_5 = arith.constant dense<0.000000e+00> : vector<2x32xf32>
    %5 = tpu.matmul %3, %4, %cst_5 {dimension_numbers = #tpu.dot_dimension_numbers<[1], [0], [0], [1], [0, 0, 1, 1], [], []>} : vector<2x4xf32>, vector<4x32xf32>, vector<2x32xf32> -> vector<2x32xf32>
    %c0_6 = arith.constant 0 : index
    %c0_7 = arith.constant 0 : index
    %6 = vector.load %arg3[%c0_6, %c0_7] : memref<1x32xf32, #tpu.memory_space<vmem>>, vector<1x32xf32>
    %7 = vector.broadcast %6 : vector<1x32xf32> to vector<2x32xf32>
    %8 = arith.addf %5, %7 : vector<2x32xf32>
    %cst_8 = arith.constant 0.000000e+00 : f32
    %9 = vector.broadcast %cst_8 : f32 to vector<2x32xf32>
    %10 = arith.maximumf %8, %9 : vector<2x32xf32>
    %c0_9 = arith.constant 0 : index
    %c0_10 = arith.constant 0 : index
    %11 = vector.load %arg4[%c0_9, %c0_10] : memref<32x128xf32, #tpu.memory_space<vmem>>, vector<32x128xf32>
    %cst_11 = arith.constant dense<0.000000e+00> : vector<2x128xf32>
    %12 = tpu.matmul %10, %11, %cst_11 {dimension_numbers = #tpu.dot_dimension_numbers<[1], [0], [0], [1], [0, 0, 1, 1], [], []>} : vector<2x32xf32>, vector<32x128xf32>, vector<2x128xf32> -> vector<2x128xf32>
    %c0_12 = arith.constant 0 : index
    %c0_13 = arith.constant 0 : index
    %13 = vector.load %arg5[%c0_12, %c0_13] : memref<1x128xf32, #tpu.memory_space<vmem>>, vector<1x128xf32>
    %14 = vector.broadcast %13 : vector<1x128xf32> to vector<2x128xf32>
    %15 = arith.addf %12, %14 : vector<2x128xf32>
    %c0_14 = arith.constant 0 : index
    %c0_15 = arith.constant 0 : index
    %16 = vector.load %arg6[%c0_14, %c0_15] : memref<2x128xf32, #tpu.memory_space<vmem>>, vector<2x128xf32>
    tpu.vector_store %arg6[%c0_14, %c0_15], %15 {strides = array<i32>} : memref<2x128xf32, #tpu.memory_space<vmem>>, vector<2x128xf32>,
    return
  }
  func.func @transform_0(%arg0: i32) -> (i32, i32, i32) {
    %c0_i32 = arith.constant 0 : i32
    %c0_i32_0 = arith.constant 0 : i32
    %c0_i32_1 = arith.constant 0 : i32
    return %arg0, %c0_i32, %c0_i32_0 : i32, i32, i32
  }
  func.func @transform_1(%arg0: i32) -> (i32, i32) {
    %c0_i32 = arith.constant 0 : i32
    %c0_i32_0 = arith.constant 0 : i32
    %c0_i32_1 = arith.constant 0 : i32
    return %c0_i32, %c0_i32_0 : i32, i32
  }
  func.func @transform_2(%arg0: i32) -> (i32, i32) {
    %c0_i32 = arith.constant 0 : i32
    %c0_i32_0 = arith.constant 0 : i32
    %c0_i32_1 = arith.constant 0 : i32
    return %c0_i32, %c0_i32_0 : i32, i32
  }
  func.func @transform_3(%arg0: i32) -> (i32, i32) {
    %c0_i32 = arith.constant 0 : i32
    %c0_i32_0 = arith.constant 0 : i32
    %c0_i32_1 = arith.constant 0 : i32
    return %c0_i32, %c0_i32_0 : i32, i32
  }
  func.func @transform_4(%arg0: i32) -> (i32, i32) {
    %c0_i32 = arith.constant 0 : i32
    %c0_i32_0 = arith.constant 0 : i32
    %c0_i32_1 = arith.constant 0 : i32
    return %c0_i32, %c0_i32_0 : i32, i32
  }
  func.func @transform_5(%arg0: i32) -> (i32, i32) {
    %c0_i32 = arith.constant 0 : i32
    %c0_i32_0 = arith.constant 0 : i32
    return %arg0, %c0_i32 : i32, i32
  }
}

</mosaic_0001>

<llo_original>
// kernel: tpu_custom_call.1
$region0: #{tpu_custom_call.1}
  #allocation0 [shape = 'u32[]', space=smem, size = 0x4, offset = 0x4, fixed_abs, tag = 'smem constant byte address 0x4 - core index']
  #allocation1 [shape = 'u32[72,128]{1,0:T(1,128)}', space=vmem, size = 0x9000, scoped, tag = 'internal scratch']
  %s0 = inlined_call_operand.hbm [shape: f32[2,4,256], index: 0, kind: input, shape index: {}]
  %s1 = inlined_call_operand.hbm [shape: f32[4,32], index: 1, kind: input, shape index: {}]
  %s2 = inlined_call_operand.vmem [shape: f32[1,32], index: 2, kind: input, shape index: {}]
  %s3 = inlined_call_operand.hbm [shape: f32[32,128], index: 3, kind: input, shape index: {}]
  %s4 = inlined_call_operand.vmem [shape: f32[1,128], index: 4, kind: input, shape index: {}]
  %s5 = inlined_call_operand.hbm [shape: f32[2,128], index: 5, kind: output, shape index: {}]
  %s6 = sld [smem:[#allocation0]]
  $region42: #{tpu_custom_call.1} parent=0
    _
  %s8 = ssub.s32 1, %s6
  %s9 = scalar_select 0, %s8, %s6
  $region1: #{tpu_custom_call.1} parent=0
    #allocation2 [shape = 'u8[8192]{0}', space=vmem, size = 0x2000, scoped, tag = 'input window, operand 0, single buffered']
    #allocation3 [shape = 's32[1]{0}', space=sflag, size = 0x4, scoped, tag = 'scoped memory for tpu_custom_call.1']
    #allocation4 [shape = 's32[1]{0}', space=sflag, size = 0x4, scoped, tag = 'scoped memory for tpu_custom_call.1']
    #allocation5 [shape = 'u8[2048]{0}', space=vmem, size = 0x800, scoped, tag = 'input window, operand 1, single buffered']
    #allocation6 [shape = 's32[1]{0}', space=sflag, size = 0x4, scoped, tag = 'scoped memory for tpu_custom_call.1']
    #allocation7 [shape = 'u8[16384]{0}', space=vmem, size = 0x4000, scoped, tag = 'input window, operand 3, single buffered']
    #allocation8 [shape = 'u8[1024]{0}', space=vmem, size = 0x400, scoped, tag = 'output window, operand 0, single buffered']
    %10 = vsyncpa [#allocation3], 0
    %11 = vsyncpa [#allocation6], 0
    %12 = vsyncpa [#allocation4], 0
    // Predicated region
    $region2: #{tpu_custom_call.1} parent=1 // pred_check
      _
    $region3: #{tpu_custom_call.1} parent=1 // pred_check_branch
      %14 = sbr.rel (0) target = $region5
    $region4: #{tpu_custom_call.1} parent=1 // pred_region
      %16 = vsyncadd [#allocation3], 0
      %s17 = sshll.u32 %s0, 4
      %s18 = int_to_ptr.hbm [resolvable:$true] %s17
      %s19 = sshll.u32 [#allocation2], 4
      %s20 = int_to_ptr.vmem [resolvable:$true] %s19
      %25 = dma.hbm_to_vmem [thread:$0]  %s18, 256, %s20, [#allocation3], 128, 128, 8
    $region5: #{tpu_custom_call.1} parent=1 // pred_fallthru
      _
    // Predicated region
    $region6: #{tpu_custom_call.1} parent=1 // pred_check
      _
    $region7: #{tpu_custom_call.1} parent=1 // pred_check_branch
      %27 = sbr.rel (0) target = $region9
    $region8: #{tpu_custom_call.1} parent=1 // pred_region
      %29 = vsyncadd [#allocation6], 0
      %s31 = sshll.u32 %s1, 4
      %s32 = int_to_ptr.hbm [resolvable:$true] %s31
      %s33 = sshll.u32 [#allocation5], 4
      %s34 = int_to_ptr.vmem [resolvable:$true] %s33
      %36 = dma.hbm_to_vmem [thread:$0]  %s32, 64, %s34, [#allocation6]
    $region9: #{tpu_custom_call.1} parent=1 // pred_fallthru
      _
    // Predicated region
    $region10: #{tpu_custom_call.1} parent=1 // pred_check
      _
    $region11: #{tpu_custom_call.1} parent=1 // pred_check_branch
      %38 = sbr.rel (0) target = $region13
    $region12: #{tpu_custom_call.1} parent=1 // pred_region
      _
    $region13: #{tpu_custom_call.1} parent=1 // pred_fallthru
      _
    // Predicated region
    $region14: #{tpu_custom_call.1} parent=1 // pred_check
      _
    $region15: #{tpu_custom_call.1} parent=1 // pred_check_branch
      %40 = sbr.rel (0) target = $region17
    $region16: #{tpu_custom_call.1} parent=1 // pred_region
      %42 = vsyncadd [#allocation6], 0
      %s43 = sshll.u32 %s3, 4
      %s44 = int_to_ptr.hbm [resolvable:$true] %s43
      %s45 = sshll.u32 [#allocation7], 4
      %s46 = int_to_ptr.vmem [resolvable:$true] %s45
      %51 = dma.hbm_to_vmem [thread:$0]  %s44, 512, %s46, [#allocation6], 128, 128, 8
    $region17: #{tpu_custom_call.1} parent=1 // pred_fallthru
      _
    // Predicated region
    $region18: #{tpu_custom_call.1} parent=1 // pred_check
      _
    $region19: #{tpu_custom_call.1} parent=1 // pred_check_branch
      %53 = sbr.rel (0) target = $region21
    $region20: #{tpu_custom_call.1} parent=1 // pred_region
      _
    $region21: #{tpu_custom_call.1} parent=1 // pred_fallthru
      _
    // Predicated region
    $region22: #{tpu_custom_call.1} parent=1 // pred_check
      _
    $region23: #{tpu_custom_call.1} parent=1 // pred_check_branch
      %55 = sbr.rel (0) target = $region25
    $region24: #{tpu_custom_call.1} parent=1 // pred_region
      %57 = dma.done [#allocation3], 256
    $region25: #{tpu_custom_call.1} parent=1 // pred_fallthru
      _
    // Predicated region
    $region26: #{tpu_custom_call.1} parent=1 // pred_check
      _
    $region27: #{tpu_custom_call.1} parent=1 // pred_check_branch
      %59 = sbr.rel (0) target = $region29
    $region28: #{tpu_custom_call.1} parent=1 // pred_region
      %61 = dma.done [#allocation6], 64
    $region29: #{tpu_custom_call.1} parent=1 // pred_fallthru
      _
    // Predicated region
    $region30: #{tpu_custom_call.1} parent=1 // pred_check
      _
    $region31: #{tpu_custom_call.1} parent=1 // pred_check_branch
      %63 = sbr.rel (0) target = $region33
    $region32: #{tpu_custom_call.1} parent=1 // pred_region
      %65 = dma.done [#allocation6], 512
    $region33: #{tpu_custom_call.1} parent=1 // pred_fallthru
      _
    %v66 = vld [vmem:[#allocation2] sm:$0xff]
    %v67 = vld [vmem:[#allocation2 + $0x8] sm:$0xff]
    %70 = vst [vmem:[#allocation1] ss:$2 sm:$0xff] %v66
    %v71 = vld.sshfl [vmem:[#allocation1] sm:$0xff pattern:$0x75316420]
    %v72 = vld.sshfl [vmem:[#allocation1 + $0x8] sm:$0xff pattern:$0x75316420]
    %s73 = scalar_lea.vmem [#allocation1], 16
    %74 = vst [vmem:[%s73] ss:$2 sm:$0xff] %v67
    %v75 = vld.sshfl [vmem:[#allocation1 + $0x10] sm:$0xff pattern:$0x75316420]
    %v76 = vld.sshfl [vmem:[#allocation1 + $0x18] sm:$0xff pattern:$0x75316420]
    %vm81 = vcmask 1043456
    %v82 = vsel %vm81, %v71, 0.0
    %v83 = vsel %vm81, %v72, 0.0
    %v84 = vadd.f32 %v82, %v83
    %85 = vadd.xlane.f32.xlu0 %v84
    %v86 = vpop.xlane.xlu0 %85
    %v87 = vsel %vm81, %v75, 0.0
    %v88 = vsel %vm81, %v76, 0.0
    %v89 = vadd.f32 %v87, %v88
    %90 = vadd.xlane.f32.xlu0 %v89
    %v91 = vpop.xlane.xlu0 %90
    %v92 = vmul.f32 %v86, 0.00390625
    %v93 = vmul.f32 %v91, 0.00390625
    %v94 = vld [vmem:[#allocation5] sm:$0xf]
    %v95 = vld [vmem:[%s2] sm:$0x1]
    %v97 = vperm.slane %v95, 0
    %v101 = vlaneseq
    %v102 = vand.u32 %v101, 127
    %v103 = vperm.slane %v92, %v102
    %v104 = vperm.slane %v93, %v102
    %vm105 = vcmask 1041409
    %v106 = vsel %vm105, %v104, %v103
    %vm107 = vcmask 31744
    %v108 = vsel %vm107, %v106, 0
    %v111 = vsel %vm81, %v94, 0
    %113 = vmatpush.msra.mxu0 0.0
    %114 = vmatpush.msra.mxu0 0.0
    %115 = vmatpush.msra.mxu0 0.0
    %116 = vmatpush.msra.mxu0 0.0
    %117 = vmatpush.msra.mxu0 0.0
    %118 = vmatpush.msra.mxu0 0.0
    %119 = vmatpush.msra.mxu0 0.0
    %120 = vmatpush.msra.mxu0 0.0
    %121 = vmatpush.msra.mxu0 0.0
    %122 = vmatpush.msra.mxu0 0.0
    %123 = vmatpush.msra.mxu0 0.0
    %124 = vmatpush.msra.mxu0 0.0
    %125 = vmatpush.msra.mxu0 0.0
    %126 = vmatpush.msra.mxu0 0.0
    %127 = vmatpush.msra.mxu0 0.0
    %128 = vmatpush.msra.mxu0 %v111
    %129 = vmatmul.f32.gmra.mxu0 %v108
    %v130 = vpop.f32.mrf.mxu0
    %v131 = vadd.f32 %v97, %v130
    %132 = vdwg.mxu0
    %v133 = vmax.f32 %v131, 0.0
    %v134 = vld [vmem:[#allocation7] sm:$0xff]
    %v135 = vld [vmem:[#allocation7 + $0x8] sm:$0xff]
    %v136 = vld [vmem:[#allocation7 + $0x10] sm:$0xff]
    %v137 = vld [vmem:[#allocation7 + $0x18] sm:$0xff]
    %v138 = vld [vmem:[%s4] sm:$0x1]
    %v140 = vperm.slane %v138, 0
    %vm142 = vcmask 261120
    %v144 = vsel %vm142, %v133, 0
    %146 = vmatpush.msra.mxu0 0.0
    %147 = vmatpush.msra.mxu0 0.0
    %148 = vmatpush.msra.mxu0 0.0
    %149 = vmatpush.msra.mxu0 0.0
    %150 = vmatpush.msra.mxu0 0.0
    %151 = vmatpush.msra.mxu0 0.0
    %152 = vmatpush.msra.mxu0 0.0
    %153 = vmatpush.msra.mxu0 0.0
    %154 = vmatpush.msra.mxu0 0.0
    %155 = vmatpush.msra.mxu0 0.0
    %156 = vmatpush.msra.mxu0 0.0
    %157 = vmatpush.msra.mxu0 0.0
    %158 = vmatpush.msra.mxu0 %v137
    %159 = vmatpush.msra.mxu0 %v136
    %160 = vmatpush.msra.mxu0 %v135
    %161 = vmatpush.msra.mxu0 %v134
    %162 = vmatmul.f32.gmra.mxu0 %v144
    %v163 = vpop.f32.mrf.mxu0
    %v164 = vadd.f32 %v140, %v163
    %165 = vdwg.mxu0
    %166 = vst [vmem:[#allocation8] sm:$0x3] %v164
    // Predicated region
    $region34: #{tpu_custom_call.1} parent=1 // pred_check
      _
    $region35: #{tpu_custom_call.1} parent=1 // pred_check_branch
      %168 = sbr.rel (0) target = $region37
    $region36: #{tpu_custom_call.1} parent=1 // pred_region
      %170 = vsyncadd [#allocation4], 0
      %s172 = sshll.u32 [#allocation8], 4
      %s173 = int_to_ptr.vmem [resolvable:$true] %s172
      %s174 = sshll.u32 %s5, 4
      %s175 = int_to_ptr.hbm [resolvable:$true] %s174
      %177 = dma.vmem_to_hbm [thread:$0]  %s173, 32, %s175, [#allocation4]
    $region37: #{tpu_custom_call.1} parent=1 // pred_fallthru
      _
    // Predicated region
    $region38: #{tpu_custom_call.1} parent=1 // pred_check
      _
    $region39: #{tpu_custom_call.1} parent=1 // pred_check_branch
      %179 = sbr.rel (0) target = $region41
    $region40: #{tpu_custom_call.1} parent=1 // pred_region
      %181 = dma.done [#allocation4], 32
    $region41: #{tpu_custom_call.1} parent=1 // pred_fallthru
      _
    %182 = vsyncpa [#allocation3], 1
    %183 = vsyncpa [#allocation6], 1
    %184 = vsyncpa [#allocation4], 1

</llo_original>
